<compile_context>
chip_gen: v7x
topology: tpu7x:2x2x1
jax: 0.10.0
libtpu: 0.0.40
codegen_flags: <defaults>
</compile_context>

<pallas_src>
import jax
import jax.numpy as jnp
from jax.experimental import pallas as pl
from jax.experimental.pallas import tpu as pltpu


def _conv1_kernel_hw_tiled(w_ref, b_ref, x_ref, o_ref):
    # w_ref: (Cout, CT)  b_ref: (Cout, 1)  x_ref: (CT, tile_hw)  o_ref: (Cout, tile_hw)
    y = jnp.dot(w_ref[...], x_ref[...], preferred_element_type=jnp.float32)  # MXU
    o_ref[...] = (y + b_ref[...]).astype(o_ref.dtype)                        # lane-dense store


def _make_n_batched_kernel(nb):
    # x_ref: (nb, CT, HW)  o_ref: (nb, Cout, HW). Small static unroll over nb keeps
    # every matmul a clean 2-D MXU op (no batched-dot transposes inside the kernel).
    def kernel(w_ref, b_ref, x_ref, o_ref):
        w = w_ref[...]
        bias = b_ref[...]
        for b in range(nb):
            y = jnp.dot(w, x_ref[b], preferred_element_type=jnp.float32)
            o_ref[b] = (y + bias).astype(o_ref.dtype)
    return kernel


def _vmem_capacity_bytes():
    try:
        cap = getattr(pltpu.get_tpu_info(), "vmem_capacity_bytes", None)
        if cap:
            return int(cap)
    except Exception:
        pass
    return 64 << 20  # conservative fallback: v7x per-TensorCore physical VMEM


def temporal_encoder_forward(x, conv1_weight, conv1_bias, *, max_lane_tile=16384):
    """x: (N, C, T, H, W). conv1_weight: (Cout, C, T, 1, 1). conv1_bias: (Cout,)."""
    N, C, T, H, W = x.shape
    C_out = conv1_weight.shape[0]
    HW = H * W
    CT = C * T
    itemsize = jnp.dtype(x.dtype).itemsize

    # Contiguous reshapes only — zero transposes outside the kernel.
    x_mat = x.reshape(N, CT, HW)                 # (N, Cin*T, H*W)
    w_mat = conv1_weight.reshape(C_out, CT)      # (Cout, Cin*T)
    b_mat = conv1_bias.reshape(C_out, 1)         # broadcast over lanes in-kernel

    vmem_cap = _vmem_capacity_bytes()
    pipeline_budget = vmem_cap // 2              # headroom for resident W/b + compiler scratch
    resident_bytes = 2 * (C_out * CT + C_out) * itemsize

    if HW >= 128:
        # ---- lane-tiled path: big, VMEM-budget-derived lane tiles ----
        per_lane = 2 * (CT + C_out) * itemsize   # double-buffered x + y column
        vmem_tile_cap = max(128, (pipeline_budget // per_lane) // 128 * 128)
        lane_cap = min(max_lane_tile, vmem_tile_cap)
        tile_hw = HW if HW <= lane_cap else (lane_cap // 128) * 128
        n_hw = pl.cdiv(HW, tile_hw)

        needed = 2 * (CT + C_out) * tile_hw * itemsize + resident_bytes + (1 << 20)
        vmem_limit = (None if needed <= (12 << 20)
                      else int(min(needed + (2 << 20), vmem_cap * 3 // 4)))

        y_mat = pl.pallas_call(
            _conv1_kernel_hw_tiled,
            out_shape=jax.ShapeDtypeStruct((N, C_out, HW), x.dtype),
            grid_spec=pltpu.PrefetchScalarGridSpec(
                num_scalar_prefetch=0,
                grid=(N, n_hw),
                in_specs=[
                    pl.BlockSpec((C_out, CT), lambda n, j: (0, 0)),             # resident W
                    pl.BlockSpec((C_out, 1), lambda n, j: (0, 0)),              # resident b
                    pl.BlockSpec((None, CT, tile_hw), lambda n, j: (n, 0, j)),  # x tile (N squeezed)
                ],
                out_specs=pl.BlockSpec((None, C_out, tile_hw), lambda n, j: (n, 0, j)),
            ),
            compiler_params=pltpu.CompilerParams(
                dimension_semantics=("parallel", "parallel"),
                vmem_limit_bytes=vmem_limit,
            ),
        )(w_mat, b_mat, x_mat)
    else:
        # ---- small-HW path (shipped config: HW = 64): batch N samples per block ----
        target_lanes = 2048                       # amortize ~0.35 us/step grid overhead
        nb = max(1, min(N, target_lanes // max(HW, 1)))
        nb = min(nb, 16)                          # bound the static unroll
        if N >= 2:
            nb = min(nb, max(1, N // 2))          # keep >=2 grid steps for v7x's 2 TCs
        per_sample = 2 * (CT + C_out) * HW * itemsize   # double-buffered x + y per sample
        nb = max(1, min(nb, pipeline_budget // max(per_sample, 1)))
        n_blocks = pl.cdiv(N, nb)

        needed = nb * per_sample + resident_bytes + (1 << 20)
        vmem_limit = (None if needed <= (12 << 20)
                      else int(min(needed + (2 << 20), vmem_cap * 3 // 4)))

        y_mat = pl.pallas_call(
            _make_n_batched_kernel(nb),
            out_shape=jax.ShapeDtypeStruct((N, C_out, HW), x.dtype),
            grid_spec=pltpu.PrefetchScalarGridSpec(
                num_scalar_prefetch=0,
                grid=(n_blocks,),
                in_specs=[
                    pl.BlockSpec((C_out, CT), lambda n: (0, 0)),      # resident W
                    pl.BlockSpec((C_out, 1), lambda n: (0, 0)),       # resident b
                    pl.BlockSpec((nb, CT, HW), lambda n: (n, 0, 0)),  # nb samples per block
                ],
                out_specs=pl.BlockSpec((nb, C_out, HW), lambda n: (n, 0, 0)),
            ),
            compiler_params=pltpu.CompilerParams(
                dimension_semantics=("parallel",),
                vmem_limit_bytes=vmem_limit,
            ),
        )(w_mat, b_mat, x_mat)

    # (N, Cout, H*W) -> (N, Cout, 1, H, W): contiguous reshape, no transpose.
    return y_mat.reshape(N, C_out, 1, H, W)


def _reference_forward(x, conv1_weight, conv1_bias):
    # Pure-JAX reference of Conv3d with kernel (T, 1, 1), padding=0.
    w = conv1_weight[:, :, :, 0, 0]                                  # (Cout, Cin, T)
    y = jnp.einsum("ncthw,oct->nohw", x, w) + conv1_bias[None, :, None, None]
    return y[:, :, None, :, :]


if __name__ == "__main__":
    # cfg.visual.backbone_dim = 8, cfg.input_len = 4 (small synthetic config)
    backbone_dim = 8
    input_len = 4
    key = jax.random.PRNGKey(0)

    # Exercise both code paths: HW = 64 (batched-N path) and HW = 256 (lane-tiled path).
    for (N, H, W) in ((2, 8, 8), (2, 16, 16)):
        k_x, k_w1, k_b1 = jax.random.split(jax.random.fold_in(key, N * H * W), 3)

        # Input: Conv3d expects NCDHW -> (N, C, T, H, W)
        x = jax.random.normal(k_x, (N, backbone_dim, input_len, H, W), dtype=jnp.float32)

        # conv1: Conv3d(backbone_dim, backbone_dim, kernel_size=(input_len, 1, 1))
        fan_in1 = backbone_dim * input_len * 1 * 1
        bound1 = 1.0 / float(jnp.sqrt(fan_in1))
        conv1_weight = jax.random.uniform(
            k_w1, (backbone_dim, backbone_dim, input_len, 1, 1),
            minval=-bound1, maxval=bound1, dtype=jnp.float32)
        conv1_bias = jax.random.uniform(
            k_b1, (backbone_dim,), minval=-bound1, maxval=bound1, dtype=jnp.float32)

        # conv2 / batchNorm2 are defined in __init__ but never used by forward();
        # no parameters are needed by the lowered forward pass.

        y = jax.block_until_ready(temporal_encoder_forward(x, conv1_weight, conv1_bias))
        y_ref = _reference_forward(x, conv1_weight, conv1_bias)
        assert y.shape == (N, backbone_dim, 1, H, W), y.shape
        assert jnp.allclose(y, y_ref, atol=1e-5, rtol=1e-5), "mismatch vs reference"

    print("KERNEL_OK")
</pallas_src>

<mosaic_0001>
module attributes {stable_mosaic.version = 11 : i64} {
  func.func @kernel(%arg0: i32, %arg1: memref<8x32xf32, #tpu.memory_space<vmem>>, %arg2: memref<8x1xf32, #tpu.memory_space<vmem>>, %arg3: memref<1x32x64xf32, #tpu.memory_space<vmem>>, %arg4: memref<1x8x64xf32, #tpu.memory_space<vmem>>) attributes {dimension_semantics = [#tpu.dimension_semantics<parallel>], iteration_bounds = array<i64: 2>, scalar_prefetch = 0 : i64, scratch_operands = 0 : i64, tpu.core_type = #tpu.core_type<tc>, window_params = [{pipeline_mode = #tpu.pipeline_mode<synchronous>, transform_indices = @transform_0, window_bounds = array<i64: 8, 32>}, {pipeline_mode = #tpu.pipeline_mode<synchronous>, transform_indices = @transform_1, window_bounds = array<i64: 8, 1>}, {transform_indices = @transform_2, window_bounds = array<i64: 1, 32, 64>}, {transform_indices = @transform_3, window_bounds = array<i64: 1, 8, 64>}]} {
    %c0 = arith.constant 0 : index
    %c0_0 = arith.constant 0 : index
    %0 = vector.load %arg1[%c0, %c0_0] : memref<8x32xf32, #tpu.memory_space<vmem>>, vector<8x32xf32>
    %c0_1 = arith.constant 0 : index
    %c0_2 = arith.constant 0 : index
    %1 = vector.load %arg2[%c0_1, %c0_2] : memref<8x1xf32, #tpu.memory_space<vmem>>, vector<8x1xf32>
    %c0_3 = arith.constant 0 : index
    %c0_4 = arith.constant 0 : index
    %c0_5 = arith.constant 0 : index
    %2 = vector.load %arg3[%c0_3, %c0_4, %c0_5] : memref<1x32x64xf32, #tpu.memory_space<vmem>>, vector<1x32x64xf32>
    %3 = vector.shape_cast %2 : vector<1x32x64xf32> to vector<32x64xf32>
    %cst = arith.constant dense<0.000000e+00> : vector<8x64xf32>
    %4 = tpu.matmul %0, %3, %cst {dimension_numbers = #tpu.dot_dimension_numbers<[1], [0], [0], [1], [0, 0, 1, 1], [], []>} : vector<8x32xf32>, vector<32x64xf32>, vector<8x64xf32> -> vector<8x64xf32>
    %5 = vector.broadcast %1 : vector<8x1xf32> to vector<8x64xf32>
    %6 = arith.addf %4, %5 : vector<8x64xf32>
    %c0_6 = arith.constant 0 : index
    %c0_7 = arith.constant 0 : index
    %c0_8 = arith.constant 0 : index
    %7 = vector.load %arg4[%c0_6, %c0_7, %c0_8] : memref<1x8x64xf32, #tpu.memory_space<vmem>>, vector<1x8x64xf32>
    %8 = vector.shape_cast %7 : vector<1x8x64xf32> to vector<8x64xf32>
    %9 = vector.shape_cast %6 : vector<8x64xf32> to vector<1x8x64xf32>
    tpu.vector_store %arg4[%c0_6, %c0_7, %c0_8], %9 {strides = array<i32>} : memref<1x8x64xf32, #tpu.memory_space<vmem>>, vector<1x8x64xf32>,
    return
  }
  func.func @transform_0(%arg0: i32) -> (i32, i32) {
    %c0_i32 = arith.constant 0 : i32
    %c0_i32_0 = arith.constant 0 : i32
    %c0_i32_1 = arith.constant 0 : i32
    return %c0_i32, %c0_i32_0 : i32, i32
  }
  func.func @transform_1(%arg0: i32) -> (i32, i32) {
    %c0_i32 = arith.constant 0 : i32
    %c0_i32_0 = arith.constant 0 : i32
    %c0_i32_1 = arith.constant 0 : i32
    return %c0_i32, %c0_i32_0 : i32, i32
  }
  func.func @transform_2(%arg0: i32) -> (i32, i32, i32) {
    %c0_i32 = arith.constant 0 : i32
    %c0_i32_0 = arith.constant 0 : i32
    %c0_i32_1 = arith.constant 0 : i32
    return %arg0, %c0_i32, %c0_i32_0 : i32, i32, i32
  }
  func.func @transform_3(%arg0: i32) -> (i32, i32, i32) {
    %c0_i32 = arith.constant 0 : i32
    %c0_i32_0 = arith.constant 0 : i32
    %c0_i32_1 = arith.constant 0 : i32
    return %arg0, %c0_i32, %c0_i32_0 : i32, i32, i32
  }
}

</mosaic_0001>

<llo_original>
// kernel: tpu_custom_call.1
$region0: #{tpu_custom_call.1}
  #allocation0 [shape = 'u32[]', space=smem, size = 0x4, offset = 0x4, fixed_abs, tag = 'smem constant byte address 0x4 - core index']
  #allocation1 [shape = 'u32[144,128]{1,0:T(1,128)}', space=vmem, size = 0x12000, scoped, tag = 'internal scratch']
  %s0 = inlined_call_operand.vmem [shape: f32[8,32], index: 0, kind: input, shape index: {}]
  %s1 = inlined_call_operand.vmem [shape: f32[8,1], index: 1, kind: input, shape index: {}]
  %s2 = inlined_call_operand.hbm [shape: f32[2,32,64], index: 2, kind: input, shape index: {}]
  %s3 = inlined_call_operand.hbm [shape: f32[2,8,64], index: 3, kind: output, shape index: {}]
  %s4 = sld [smem:[#allocation0]]
  $region49: #{tpu_custom_call.1} parent=0
    _
  %s6 = ssub.s32 1, %s4
  %s7 = scalar_select 0, %s6, %s4
  $region1: #{tpu_custom_call.1} parent=0
    #allocation2 [shape = 'u8[32768]{0}', space=vmem, size = 0x8000, scoped, tag = 'input window, operand 2']
    #allocation3 [shape = 's32[2]{0}', space=sflag, size = 0x8, scoped, tag = 'scoped memory for tpu_custom_call.1']
    #allocation4 [shape = 's32[2]{0}', space=sflag, size = 0x8, scoped, tag = 'scoped memory for tpu_custom_call.1']
    #allocation5 [shape = 'u8[8192]{0}', space=vmem, size = 0x2000, scoped, tag = 'output window, operand 0']
    %8 = vsyncpa [#allocation3], 0
    %s9 = scalar_lea.sflag [#allocation3], 1
    %10 = vsyncpa %s9, 0
    %11 = vsyncpa [#allocation4], 0
    %s12 = scalar_lea.sflag [#allocation4], 1
    %13 = vsyncpa %s12, 0
    loop: start=0, step=1, limit=4
    $region2: #{tpu_custom_call.1} parent=1 // loop_pre_header
      _
    $region3: #{tpu_custom_call.1} parent=1 // loop_header
      %s15 = sphi 0, %s19
      %p16 = scmp.ge.s32.totalorder %s15, 4
      %s23 = sphi 0, %s23
      %s25 = sphi 0, %s23
      %s26 = sphi 0, %s25
      %s40 = sphi 0, %s26
      %s44 = sphi 0, %s44
      %s46 = sphi 0, %s44
      %s47 = sphi 0, %s46
      %s61 = sphi 0, %s47
      %s67 = sphi 0, %s69
      %s70 = sphi 0, %s67
      %s71 = sphi 0, %s70
      %s87 = sphi 0, %s71
      %s93 = sphi 0, %s95
      %s96 = sphi 0, %s93
      %s97 = sphi 0, %s96
      %s113 = sphi 0, %s97
    $region4: #{tpu_custom_call.1} parent=1 // loop_header_branch
      %18 = sbr.rel (%p16) target = $region8
    $region5: #{tpu_custom_call.1} parent=1 // loop_body
      %s20 = ssub.s32 %s15, 1
      %s21 = ssub.s32 %s15, 2
      %s22 = sadd.s32 %s15, 1
      %s24 = sadd.s32 %s23, 1
      %p27 = scmp.eq.s32.totalorder %s15, 1
      %p28 = scmp.ne.s32.totalorder %s23, %s25
      %p29 = scmp.eq.s32.totalorder %s15, 0
      %p30 = por %p28, %p29
      %p31 = scmp.ne.s32.totalorder %s23, %s25
      %p32 = scmp.eq.s32.totalorder %s20, 1
      %p33 = por %p31, %p32
      %p34 = scmp.ne.s32.totalorder %s25, %s26
      %p35 = scmp.eq.s32.totalorder %s20, 0
      %p36 = por %p34, %p35
      %p37 = scmp.ne.s32.totalorder %s25, %s26
      %p38 = scmp.eq.s32.totalorder %s21, 1
      %p39 = por %p37, %p38
      %p41 = scmp.ne.s32.totalorder %s26, %s40
      %p42 = scmp.eq.s32.totalorder %s21, 0
      %p43 = por %p41, %p42
      %s45 = sadd.s32 %s44, 1
      %p48 = scmp.eq.s32.totalorder %s15, 1
      %p49 = scmp.ne.s32.totalorder %s44, %s46
      %p50 = scmp.eq.s32.totalorder %s15, 0
      %p51 = por %p49, %p50
      %p52 = scmp.ne.s32.totalorder %s44, %s46
      %p53 = scmp.eq.s32.totalorder %s20, 1
      %p54 = por %p52, %p53
      %p55 = scmp.ne.s32.totalorder %s46, %s47
      %p56 = scmp.eq.s32.totalorder %s20, 0
      %p57 = por %p55, %p56
      %p58 = scmp.ne.s32.totalorder %s46, %s47
      %p59 = scmp.eq.s32.totalorder %s21, 1
      %p60 = por %p58, %p59
      %p62 = scmp.ne.s32.totalorder %s47, %s61
      %p63 = scmp.eq.s32.totalorder %s21, 0
      %p64 = por %p62, %p63
      %s65 = ssub.s32 %s15, %s22
      %p66 = scmp.eq.s32.totalorder %s65, 0
      %s68 = sadd.s32 %s67, 1
      %s69 = scalar_select %p66, %s67, %s68
      %p72 = pneg %p66
      %p73 = scmp.eq.s32.totalorder %s15, 1
      %p74 = por %p72, %p73
      %p75 = scmp.ne.s32.totalorder %s67, %s70
      %p76 = scmp.eq.s32.totalorder %s15, 0
      %p77 = por %p75, %p76
      %p78 = scmp.ne.s32.totalorder %s67, %s70
      %p79 = scmp.eq.s32.totalorder %s20, 1
      %p80 = por %p78, %p79
      %p81 = scmp.ne.s32.totalorder %s70, %s71
      %p82 = scmp.eq.s32.totalorder %s20, 0
      %p83 = por %p81, %p82
      %p84 = scmp.ne.s32.totalorder %s70, %s71
      %p85 = scmp.eq.s32.totalorder %s21, 1
      %p86 = por %p84, %p85
      %p88 = scmp.ne.s32.totalorder %s71, %s87
      %p89 = scmp.eq.s32.totalorder %s21, 0
      %p90 = por %p88, %p89
      %s91 = ssub.s32 %s15, %s22
      %p92 = scmp.eq.s32.totalorder %s91, 0
      %s94 = sadd.s32 %s93, 1
      %s95 = scalar_select %p92, %s93, %s94
      %p98 = pneg %p92
      %p99 = scmp.eq.s32.totalorder %s15, 1
      %p100 = por %p98, %p99
      %p101 = scmp.ne.s32.totalorder %s93, %s96
      %p102 = scmp.eq.s32.totalorder %s15, 0
      %p103 = por %p101, %p102
      %p104 = scmp.ne.s32.totalorder %s93, %s96
      %p105 = scmp.eq.s32.totalorder %s20, 1
      %p106 = por %p104, %p105
      %p107 = scmp.ne.s32.totalorder %s96, %s97
      %p108 = scmp.eq.s32.totalorder %s20, 0
      %p109 = por %p107, %p108
      %p110 = scmp.ne.s32.totalorder %s96, %s97
      %p111 = scmp.eq.s32.totalorder %s21, 1
      %p112 = por %p110, %p111
      %p114 = scmp.ne.s32.totalorder %s97, %s113
      %p115 = scmp.eq.s32.totalorder %s21, 0
      %p116 = por %p114, %p115
      %p117 = scmp.le.s32.totalorder 1, %s15
      %p118 = scmp.lt.s32.totalorder %s15, 3
      %p119 = pnand %p117, %p118
      %p120 = pneg %p119
      // Predicated region
      $region9: #{tpu_custom_call.1} parent=5 // pred_check
        _
      $region10: #{tpu_custom_call.1} parent=5 // pred_check_branch
        %122 = sbr.rel (%p119) target = $region12
      $region11: #{tpu_custom_call.1} parent=5 // pred_region
        %s123 = ssub.s32 %s15, 1
        // Predicated region
        $region13: #{tpu_custom_call.1} parent=11 // pred_check
          %p124 = pneg %p36
        $region14: #{tpu_custom_call.1} parent=11 // pred_check_branch
          %126 = sbr.rel (%p124) target = $region16
        $region15: #{tpu_custom_call.1} parent=11 // pred_region
          _
        $region16: #{tpu_custom_call.1} parent=11 // pred_fallthru
          _
        // Predicated region
        $region17: #{tpu_custom_call.1} parent=11 // pred_check
          %p127 = pneg %p57
        $region18: #{tpu_custom_call.1} parent=11 // pred_check_branch
          %129 = sbr.rel (%p127) target = $region20
        $region19: #{tpu_custom_call.1} parent=11 // pred_region
          _
        $region20: #{tpu_custom_call.1} parent=11 // pred_fallthru
          _
      $region12: #{tpu_custom_call.1} parent=5 // pred_fallthru
        _
      %p130 = scmp.lt.s32.totalorder %s15, 2
      // Predicated region
      $region21: #{tpu_custom_call.1} parent=5 // pred_check
        %p131 = pneg %p130
      $region22: #{tpu_custom_call.1} parent=5 // pred_check_branch
        %133 = sbr.rel (%p131) target = $region24
      $region23: #{tpu_custom_call.1} parent=5 // pred_region
        // Predicated region
        $region25: #{tpu_custom_call.1} parent=23 // pred_check
          %p134 = pneg %p77
        $region26: #{tpu_custom_call.1} parent=23 // pred_check_branch
          %136 = sbr.rel (%p134) target = $region28
        $region27: #{tpu_custom_call.1} parent=23 // pred_region
          %s137 = sand.u32 %s67, 1
          %s138 = scalar_lea.sflag [#allocation3], %s137
          %s139 = sand.u32 %s67, 1
          %s140 = smul.addr %s139, 32
          %s141 = scalar_lea.vmem [#allocation2], %s140
          %s143 = ssub.s32 512, 512
          %144 = vsyncadd %s138, %s143
          %s145 = smul.addr %s15, 4
          %s146 = smul.addr %s145, 128
          %s147 = scalar_lea.hbm %s2, %s146
          %s148 = sshll.u32 %s141, 4
          %s149 = int_to_ptr.vmem [resolvable:$true] %s148
          %154 = dma.hbm_to_vmem [thread:$0]  %s147, 512, %s149, %s138, 128, 128, 8
        $region28: #{tpu_custom_call.1} parent=23 // pred_fallthru
          _
      $region24: #{tpu_custom_call.1} parent=5 // pred_fallthru
        _
      %p155 = scmp.le.s32.totalorder 1, %s15
      %p156 = scmp.lt.s32.totalorder %s15, 3
      %p157 = pnand %p155, %p156
      %p158 = pneg %p157
      // Predicated region
      $region29: #{tpu_custom_call.1} parent=5 // pred_check
        _
      $region30: #{tpu_custom_call.1} parent=5 // pred_check_branch
        %160 = sbr.rel (%p157) target = $region32
      $region31: #{tpu_custom_call.1} parent=5 // pred_region
        %s161 = ssub.s32 %s15, 1
        %s162 = sand.u32 %s70, 1
        %s163 = scalar_lea.sflag [#allocation3], %s162
        %s164 = sand.u32 %s70, 1
        %s165 = smul.addr %s164, 32
        %s166 = scalar_lea.vmem [#allocation2], %s165
        // Predicated region
        $region33: #{tpu_custom_call.1} parent=31 // pred_check
          %p167 = pneg %p83
        $region34: #{tpu_custom_call.1} parent=31 // pred_check_branch
          %169 = sbr.rel (%p167) target = $region36
        $region35: #{tpu_custom_call.1} parent=31 // pred_region
          %170 = dma.done %s163, 512
        $region36: #{tpu_custom_call.1} parent=31 // pred_fallthru
          _
        %p171 = pneg %p36
        %p172 = pneg %p33
        %p173 = pneg %p57
        %p174 = pneg %p54
        %s175 = sand.u32 %s70, 1
        %s176 = scalar_lea.sflag [#allocation3], %s175
        %s177 = sand.u32 %s70, 1
        %s178 = smul.addr %s177, 32
        %s179 = scalar_lea.vmem [#allocation2], %s178
        %p180 = pneg %p83
        %p181 = pneg %p80
        %p182 = pneg %p109
        %p183 = pneg %p106
        %s184 = sand.u32 %s96, 1
        %s185 = scalar_lea.sflag [#allocation4], %s184
        %s186 = sand.u32 %s96, 1
        %s187 = smul.addr %s186, 8
        %s188 = scalar_lea.vmem [#allocation5], %s187
        %v189 = vld [vmem:[%s0] sm:$0xff]
        %v190 = vld [vmem:[%s1] sm:$0xff]
        %v191 = vld [vmem:[%s166] sm:$0xff]
        %v192 = vld [vmem:[%s166 + $0x8] sm:$0xff]
        %v193 = vld [vmem:[%s166 + $0x10] sm:$0xff]
        %v194 = vld [vmem:[%s166 + $0x18] sm:$0xff]
        %196 = vset.pattern.permute.xlu0 0
        %197 = vperm.xlu0 %196, %v190
        %v198 = vpop.permute.xlu0 %197
        %vm200 = vcmask 261120
        %v202 = vsel %vm200, %v189, 0
        %204 = vmatprep.subr.mxu0 0.0
        %205 = vmatpush1.msra.mxu0 %v191
        %206 = vmatprep.subr.mxu0 0.0
        %207 = vmatpush1.msra.mxu0 %v192
        %208 = vmatprep.subr.mxu0 0.0
        %209 = vmatpush1.msra.mxu0 %v193
        %210 = vmatprep.subr.mxu0 0.0
        %211 = vmatpush1.msra.mxu0 %v194
        %212 = vmatprep.subr.mxu0 0.0
        %213 = vmatpush1.msra.mxu0 0.0
        %214 = vmatprep.subr.mxu0 0.0
        %215 = vmatpush1.msra.mxu0 0.0
        %216 = vmatprep.subr.mxu0 0.0
        %217 = vmatpush1.msra.mxu0 0.0
        %218 = vmatprep.subr.mxu0 0.0
        %219 = vmatpush1.msra.mxu0 0.0
        %220 = vmatprep.subr.mxu0 0.0
        %221 = vmatpush1.msra.mxu0 0.0
        %222 = vmatprep.subr.mxu0 0.0
        %223 = vmatpush1.msra.mxu0 0.0
        %224 = vmatprep.subr.mxu0 0.0
        %225 = vmatpush1.msra.mxu0 0.0
        %226 = vmatprep.subr.mxu0 0.0
        %227 = vmatpush1.msra.mxu0 0.0
        %228 = vmatprep.subr.mxu0 0.0
        %229 = vmatpush1.msra.mxu0 0.0
        %230 = vmatprep.subr.mxu0 0.0
        %231 = vmatpush1.msra.mxu0 0.0
        %232 = vmatprep.subr.mxu0 0.0
        %233 = vmatpush1.msra.mxu0 0.0
        %234 = vmatprep.subr.mxu0 0.0
        %235 = vmatpush1.msra.mxu0 0.0
        %236 = vmatprep.subr.mxu0 0.0
        %237 = vmatpush1.msra.mxu0 0.0
        %238 = vmatprep.subr.mxu0 0.0
        %239 = vmatpush1.msra.mxu0 0.0
        %240 = vmatprep.subr.mxu0 0.0
        %241 = vmatpush1.msra.mxu0 0.0
        %242 = vmatprep.subr.mxu0 0.0
        %243 = vmatpush1.msra.mxu0 0.0
        %244 = vmatprep.subr.mxu0 0.0
        %245 = vmatpush1.msra.mxu0 0.0
        %246 = vmatprep.subr.mxu0 0.0
        %247 = vmatpush1.msra.mxu0 0.0
        %248 = vmatprep.subr.mxu0 0.0
        %249 = vmatpush1.msra.mxu0 0.0
        %250 = vmatprep.subr.mxu0 0.0
        %251 = vmatpush1.msra.mxu0 0.0
        %252 = vmatprep.subr.mxu0 0.0
        %253 = vmatpush1.msra.mxu0 0.0
        %254 = vmatprep.subr.mxu0 0.0
        %255 = vmatpush1.msra.mxu0 0.0
        %256 = vmatprep.subr.mxu0 0.0
        %257 = vmatpush1.msra.mxu0 0.0
        %258 = vmatprep.subr.mxu0 0.0
        %259 = vmatpush1.msra.mxu0 0.0
        %260 = vmatprep.subr.mxu0 0.0
        %261 = vmatpush1.msra.mxu0 0.0
        %262 = vmatprep.subr.mxu0 0.0
        %263 = vmatpush1.msra.mxu0 0.0
        %264 = vmatprep.subr.mxu0 0.0
        %265 = vmatpush1.msra.mxu0 0.0
        %266 = vmatprep.subr.mxu0 0.0
        %267 = vmatpush1.msra.mxu0 0.0
        %268 = vmatprep.mubr.f32.mxu0 0.0
        %269 = vmatmul.mubr.f32.gmra.mrb[0].mxu0 %v202
        %v270 = vpop.f32.mrb[0].mxu0
        %v271 = vadd.f32 %v198, %v270
        %v272 = vpop.f32.mrb[0].mxu0
        %273 = vdwg.mxu0
        %vm274 = vcmask 523264
        %275 = vst.msk [vmem:[%s188] sm:$0xff] %vm274, %v271
        %s276 = sand.u32 %s96, 1
        %s277 = scalar_lea.sflag [#allocation4], %s276
        %s278 = sand.u32 %s96, 1
        %s279 = smul.addr %s278, 8
        %s280 = scalar_lea.vmem [#allocation5], %s279
        // Predicated region
        $region37: #{tpu_custom_call.1} parent=31 // pred_check
          %p281 = pneg %p106
        $region38: #{tpu_custom_call.1} parent=31 // pred_check_branch
          %283 = sbr.rel (%p281) target = $region40
        $region39: #{tpu_custom_call.1} parent=31 // pred_region
          %s285 = ssub.s32 128, 128
          %286 = vsyncadd %s277, %s285
          %s287 = smul.addr %s20, 128
          %s288 = scalar_lea.hbm %s3, %s287
          %s290 = sshll.u32 %s280, 4
          %s291 = int_to_ptr.vmem [resolvable:$true] %s290
          %293 = dma.vmem_to_hbm [thread:$0]  %s291, 128, %s288, %s277
        $region40: #{tpu_custom_call.1} parent=31 // pred_fallthru
          _
      $region32: #{tpu_custom_call.1} parent=5 // pred_fallthru
        _
      %p294 = scmp.le.s32.totalorder 2, %s15
      // Predicated region
      $region41: #{tpu_custom_call.1} parent=5 // pred_check
        %p295 = pneg %p294
      $region42: #{tpu_custom_call.1} parent=5 // pred_check_branch
        %297 = sbr.rel (%p295) target = $region44
      $region43: #{tpu_custom_call.1} parent=5 // pred_region
        %s298 = ssub.s32 %s15, 2
        // Predicated region
        $region45: #{tpu_custom_call.1} parent=43 // pred_check
          %p299 = pneg %p112
        $region46: #{tpu_custom_call.1} parent=43 // pred_check_branch
          %301 = sbr.rel (%p299) target = $region48
        $region47: #{tpu_custom_call.1} parent=43 // pred_region
          %s302 = sand.u32 %s97, 1
          %s303 = scalar_lea.sflag [#allocation4], %s302
          %s304 = sand.u32 %s97, 1
          %s305 = smul.addr %s304, 8
          %s306 = scalar_lea.vmem [#allocation5], %s305
          %307 = dma.done %s303, 128
        $region48: #{tpu_custom_call.1} parent=43 // pred_fallthru
          _
      $region44: #{tpu_custom_call.1} parent=5 // pred_fallthru
        _
    $region6: #{tpu_custom_call.1} parent=1 // loop_footer
      %s19 = sadd.s32 1, %s15
    $region7: #{tpu_custom_call.1} parent=1 // loop_footer_branch
      %14 = sbr.rel target = $region3
    $region8: #{tpu_custom_call.1} parent=1 // loop_exit
      _
    %308 = vsyncpa [#allocation3], 1
    %s309 = scalar_lea.sflag [#allocation3], 1
    %310 = vsyncpa %s309, 1
    %311 = vsyncpa [#allocation4], 1
    %s312 = scalar_lea.sflag [#allocation4], 1
    %313 = vsyncpa %s312, 1

</llo_original>
